<compile_context>
chip_gen: v7x
topology: tpu7x:2x2x1
jax: 0.10.0
libtpu: 0.0.40
codegen_flags: <defaults>
</compile_context>

<pallas_src>
import functools

import jax
import jax.numpy as jnp
from jax.experimental import pallas as pl
from jax.experimental.pallas import tpu as pltpu


def _learnedvector_kernel(x_ref, w_ref, b_ref, o_ref, *, seq_len):
    """sigmoid(relu(x) @ W + b) * seq_len on one row tile.

    x_ref: (tm, P*E)  lane-packed rows (P original rows per packed row)
    w_ref: (P*E, P)   block-diagonal fused weight (segmented reduce on the MXU)
    b_ref: (1,)       scalar bias in SMEM
    o_ref: (tm, P)
    """
    h = jnp.maximum(x_ref[...], 0.0)                                # VPU ReLU, lane-dense
    z = jnp.dot(h, w_ref[...], preferred_element_type=jnp.float32)  # MXU segmented reduce
    z = z + b_ref[0]                                                # scalar bias from SMEM
    o_ref[...] = (jax.nn.sigmoid(z) * seq_len).astype(o_ref.dtype)


def _pick_row_tile(n_rows, row_padded_bytes, *, tile_bytes=2 << 20,
                   min_steps=2, min_rows_to_split=512):
    """Row tile: ~2 MiB of (lane-padded) input per step, multiple of 8 (or the
    full extent), and >= 2 grid steps when there is enough work (megacore)."""
    cap = max(8, (tile_bytes // row_padded_bytes) // 8 * 8)
    if n_rows <= min(cap, max(8, min_rows_to_split)):
        return n_rows                                   # single full-extent block
    n_blocks = max(min_steps, -(-n_rows // cap))
    tm = -(-n_rows // n_blocks)
    tm = ((tm + 7) // 8) * 8
    return min(tm, cap, n_rows)


def learnedvector_forward(x, w1_t, w2_t, b2):
    """x: (B, L, E).  w1_t = W1.T: (E, H).  w2_t = W2.T: (H, 1).  b2: (1,)."""
    B, L, E = x.shape
    BL = B * L

    # Algebraic fusion of the two linears (exact up to fp32 summation order).
    w_eff = (w1_t.astype(jnp.float32) @ w2_t.astype(jnp.float32)).reshape(E)  # (E,)

    # Lane-pack P consecutive rows into one 128-lane packed row when the
    # reshape is metadata-only; otherwise fall back to unpacked rows.
    P = 128 // E if (E < 128 and 128 % E == 0 and BL % (128 // E) == 0) else 1
    PE = P * E

    xf = x.reshape(BL // P, PE)                         # free metadata reshape
    if P == 1:
        w = w_eff.reshape(E, 1).astype(jnp.float32)
    else:
        # Block-diagonal weight: w[j*E + k, j] = w_eff[k].
        w = (jnp.eye(P, dtype=jnp.float32)[:, None, :]
             * w_eff[None, :, None]).reshape(PE, P)

    n_rows = BL // P
    padded_cols = -(-PE // 128) * 128                   # lane padding of the VMEM tile
    tm = _pick_row_tile(n_rows, padded_cols * 4)
    grid = (pl.cdiv(n_rows, tm),)                       # ragged last block: no jnp.pad

    out = pl.pallas_call(
        functools.partial(_learnedvector_kernel, seq_len=float(L)),
        out_shape=jax.ShapeDtypeStruct((n_rows, P), x.dtype),
        grid=grid,
        in_specs=[
            pl.BlockSpec((tm, PE), lambda i: (i, 0)),            # x rows, streamed
            pl.BlockSpec((PE, P), lambda i: (0, 0)),             # fused weight, resident
            pl.BlockSpec(memory_space=pltpu.MemorySpace.SMEM),   # scalar bias
        ],
        out_specs=pl.BlockSpec((tm, P), lambda i: (i, 0)),
        compiler_params=pltpu.CompilerParams(
            dimension_semantics=("parallel",)),
    )(xf, w, b2.astype(jnp.float32))

    # (BL//P, P) -> (B, L, 1) is a metadata-only reshape (row-major match).
    return out.reshape(B, L, 1)


if __name__ == "__main__":
    # Small shapes consistent with the module: batch=2, seq L=8, embed=32, hidden=32
    B, L, E, H = 2, 8, 32, 32

    key = jax.random.PRNGKey(0)
    kx, kw1, kw2, kb2 = jax.random.split(key, 4)

    x = jax.random.normal(kx, (B, L, E), dtype=jnp.float32)

    # PyTorch nn.Linear stores weight as (out, in); pre-transpose to (in, out).
    w1 = jax.random.normal(kw1, (H, E), dtype=jnp.float32) * (1.0 / jnp.sqrt(E))
    w2 = jax.random.normal(kw2, (1, H), dtype=jnp.float32) * (1.0 / jnp.sqrt(H))
    b2 = jax.random.normal(kb2, (1,), dtype=jnp.float32) * 0.1

    out = learnedvector_forward(x, w1.T, w2.T, b2)
    out = jax.block_until_ready(out)

    # Pure-JAX reference (unfused, matches the PyTorch forward; wh_bias is unused).
    ref = jax.nn.sigmoid(jnp.maximum(x, 0.0) @ w1.T @ w2.T + b2) * L
    assert out.shape == (B, L, 1)
    assert jnp.allclose(out, ref, atol=1e-4, rtol=1e-5), float(
        jnp.max(jnp.abs(out - ref)))

    print("KERNEL_OK")
</pallas_src>

<mosaic_0001>
module attributes {stable_mosaic.version = 11 : i64} {
  func.func @_learnedvector_kernel(%arg0: i32, %arg1: memref<4x128xf32, #tpu.memory_space<vmem>>, %arg2: memref<128x4xf32, #tpu.memory_space<vmem>>, %arg3: memref<1xf32, #tpu.memory_space<smem>>, %arg4: memref<4x4xf32, #tpu.memory_space<vmem>>) attributes {dimension_semantics = [#tpu.dimension_semantics<parallel>], iteration_bounds = array<i64: 1>, scalar_prefetch = 0 : i64, scratch_operands = 0 : i64, tpu.core_type = #tpu.core_type<tc>, window_params = [{transform_indices = @transform_0, window_bounds = array<i64: 4, 128>}, {pipeline_mode = #tpu.pipeline_mode<synchronous>, transform_indices = @transform_1, window_bounds = array<i64: 128, 4>}, {transform_indices = @transform_2, window_bounds = array<i64: 1>}, {transform_indices = @transform_3, window_bounds = array<i64: 4, 4>}]} {
    %c0 = arith.constant 0 : index
    %c0_0 = arith.constant 0 : index
    %0 = vector.load %arg1[%c0, %c0_0] : memref<4x128xf32, #tpu.memory_space<vmem>>, vector<4x128xf32>
    %cst = arith.constant 0.000000e+00 : f32
    %1 = vector.broadcast %cst : f32 to vector<4x128xf32>
    %2 = arith.maximumf %0, %1 : vector<4x128xf32>
    %c0_1 = arith.constant 0 : index
    %c0_2 = arith.constant 0 : index
    %3 = vector.load %arg2[%c0_1, %c0_2] : memref<128x4xf32, #tpu.memory_space<vmem>>, vector<128x4xf32>
    %cst_3 = arith.constant dense<0.000000e+00> : vector<4x4xf32>
    %4 = tpu.matmul %2, %3, %cst_3 {dimension_numbers = #tpu.dot_dimension_numbers<[1], [0], [0], [1], [0, 0, 1, 1], [], []>} : vector<4x128xf32>, vector<128x4xf32>, vector<4x4xf32> -> vector<4x4xf32>
    %c0_4 = arith.constant 0 : index
    %5 = memref.load %arg3[%c0_4] : memref<1xf32, #tpu.memory_space<smem>>
    %6 = vector.broadcast %5 : f32 to vector<4x4xf32>
    %7 = arith.addf %4, %6 : vector<4x4xf32>
    %8 = arith.negf %7 : vector<4x4xf32>
    %9 = math.exp %8 : vector<4x4xf32>
    %cst_5 = arith.constant 1.000000e+00 : f32
    %10 = vector.broadcast %cst_5 : f32 to vector<4x4xf32>
    %11 = arith.addf %10, %9 : vector<4x4xf32>
    %12 = arith.divf %10, %11 : vector<4x4xf32>
    %cst_6 = arith.constant 8.000000e+00 : f32
    %13 = vector.broadcast %cst_6 : f32 to vector<4x4xf32>
    %14 = arith.mulf %12, %13 : vector<4x4xf32>
    %c0_7 = arith.constant 0 : index
    %c0_8 = arith.constant 0 : index
    %15 = vector.load %arg4[%c0_7, %c0_8] : memref<4x4xf32, #tpu.memory_space<vmem>>, vector<4x4xf32>
    tpu.vector_store %arg4[%c0_7, %c0_8], %14 {strides = array<i32>} : memref<4x4xf32, #tpu.memory_space<vmem>>, vector<4x4xf32>,
    return
  }
  func.func @transform_0(%arg0: i32) -> (i32, i32) {
    %c0_i32 = arith.constant 0 : i32
    %c0_i32_0 = arith.constant 0 : i32
    return %arg0, %c0_i32 : i32, i32
  }
  func.func @transform_1(%arg0: i32) -> (i32, i32) {
    %c0_i32 = arith.constant 0 : i32
    %c0_i32_0 = arith.constant 0 : i32
    %c0_i32_1 = arith.constant 0 : i32
    return %c0_i32, %c0_i32_0 : i32, i32
  }
  func.func @transform_2(%arg0: i32) -> i32 {
    %c0_i32 = arith.constant 0 : i32
    %c0_i32_0 = arith.constant 0 : i32
    return %c0_i32 : i32
  }
  func.func @transform_3(%arg0: i32) -> (i32, i32) {
    %c0_i32 = arith.constant 0 : i32
    %c0_i32_0 = arith.constant 0 : i32
    return %arg0, %c0_i32 : i32, i32
  }
}

</mosaic_0001>

<llo_original>
// kernel: tpu_custom_call.1
$region0: #{tpu_custom_call.1}
  #allocation0 [shape = 'u32[]', space=smem, size = 0x4, offset = 0x4, fixed_abs, tag = 'smem constant byte address 0x4 - core index']
  #allocation1 [shape = 'u32[144,128]{1,0:T(1,128)}', space=vmem, size = 0x12000, scoped, tag = 'internal scratch']
  #allocation2 [shape = 'f32[1]{0:T(128)S(6)}', space=smem, size = 0x200, scoped, tag = 'scoped memory for tpu_custom_call.1']
  %s0 = inlined_call_operand.vmem [shape: f32[4,128], index: 0, kind: input, shape index: {}]
  %s1 = inlined_call_operand.vmem [shape: f32[128,4], index: 1, kind: input, shape index: {}]
  %s2 = inlined_call_operand.<no memory space> [shape: f32[1], index: 2, kind: input, shape index: {}]
  %s3 = inlined_call_operand.hbm [shape: f32[4,4], index: 3, kind: output, shape index: {}]
  %s4 = sld [smem:[#allocation0]]
  $region22: #{tpu_custom_call.1} parent=0
    _
  %s6 = ssub.s32 1, %s4
  %s7 = scalar_select 0, %s6, %s4
  %8 = sst [smem:[#allocation2]] %s2
  $region1: #{tpu_custom_call.1} parent=0
    #allocation3 [shape = 'u8[2048]{0}', space=vmem, size = 0x800, scoped, tag = 'output window, operand 0, single buffered']
    #allocation4 [shape = 's32[1]{0}', space=sflag, size = 0x4, scoped, tag = 'scoped memory for tpu_custom_call.1']
    %9 = vsyncpa [#allocation4], 0
    // Predicated region
    $region2: #{tpu_custom_call.1} parent=1 // pred_check
      _
    $region3: #{tpu_custom_call.1} parent=1 // pred_check_branch
      %11 = sbr.rel (0) target = $region5
    $region4: #{tpu_custom_call.1} parent=1 // pred_region
      _
    $region5: #{tpu_custom_call.1} parent=1 // pred_fallthru
      _
    // Predicated region
    $region6: #{tpu_custom_call.1} parent=1 // pred_check
      _
    $region7: #{tpu_custom_call.1} parent=1 // pred_check_branch
      %13 = sbr.rel (0) target = $region9
    $region8: #{tpu_custom_call.1} parent=1 // pred_region
      _
    $region9: #{tpu_custom_call.1} parent=1 // pred_fallthru
      _
    // Predicated region
    $region10: #{tpu_custom_call.1} parent=1 // pred_check
      _
    $region11: #{tpu_custom_call.1} parent=1 // pred_check_branch
      %15 = sbr.rel (0) target = $region13
    $region12: #{tpu_custom_call.1} parent=1 // pred_region
      _
    $region13: #{tpu_custom_call.1} parent=1 // pred_fallthru
      _
    %v16 = vld [vmem:[%s0] sm:$0xf]
    %v17 = vmax.f32 %v16, 0.0
    %v18 = vld [vmem:[%s1] sm:$0xff]
    %v19 = vld [vmem:[%s1 + $0x8] sm:$0xff]
    %v20 = vld [vmem:[%s1 + $0x10] sm:$0xff]
    %v21 = vld [vmem:[%s1 + $0x18] sm:$0xff]
    %v22 = vld [vmem:[%s1 + $0x20] sm:$0xff]
    %v23 = vld [vmem:[%s1 + $0x28] sm:$0xff]
    %v24 = vld [vmem:[%s1 + $0x30] sm:$0xff]
    %v25 = vld [vmem:[%s1 + $0x38] sm:$0xff]
    %v26 = vld [vmem:[%s1 + $0x40] sm:$0xff]
    %v27 = vld [vmem:[%s1 + $0x48] sm:$0xff]
    %v28 = vld [vmem:[%s1 + $0x50] sm:$0xff]
    %v29 = vld [vmem:[%s1 + $0x58] sm:$0xff]
    %v30 = vld [vmem:[%s1 + $0x60] sm:$0xff]
    %v31 = vld [vmem:[%s1 + $0x68] sm:$0xff]
    %v32 = vld [vmem:[%s1 + $0x70] sm:$0xff]
    %v33 = vld [vmem:[%s1 + $0x78] sm:$0xff]
    %s34 = sld [smem:[#allocation2]]
    %v35 = vstv %s34
    %36 = vmatprep.subr.mxu0 0.0
    %37 = vmatpush1.msra.mxu0 %v18
    %38 = vmatprep.subr.mxu0 0.0
    %39 = vmatpush1.msra.mxu0 %v19
    %40 = vmatprep.subr.mxu0 0.0
    %41 = vmatpush1.msra.mxu0 %v20
    %42 = vmatprep.subr.mxu0 0.0
    %43 = vmatpush1.msra.mxu0 %v21
    %44 = vmatprep.subr.mxu0 0.0
    %45 = vmatpush1.msra.mxu0 %v22
    %46 = vmatprep.subr.mxu0 0.0
    %47 = vmatpush1.msra.mxu0 %v23
    %48 = vmatprep.subr.mxu0 0.0
    %49 = vmatpush1.msra.mxu0 %v24
    %50 = vmatprep.subr.mxu0 0.0
    %51 = vmatpush1.msra.mxu0 %v25
    %52 = vmatprep.subr.mxu0 0.0
    %53 = vmatpush1.msra.mxu0 %v26
    %54 = vmatprep.subr.mxu0 0.0
    %55 = vmatpush1.msra.mxu0 %v27
    %56 = vmatprep.subr.mxu0 0.0
    %57 = vmatpush1.msra.mxu0 %v28
    %58 = vmatprep.subr.mxu0 0.0
    %59 = vmatpush1.msra.mxu0 %v29
    %60 = vmatprep.subr.mxu0 0.0
    %61 = vmatpush1.msra.mxu0 %v30
    %62 = vmatprep.subr.mxu0 0.0
    %63 = vmatpush1.msra.mxu0 %v31
    %64 = vmatprep.subr.mxu0 0.0
    %65 = vmatpush1.msra.mxu0 %v32
    %66 = vmatprep.subr.mxu0 0.0
    %67 = vmatpush1.msra.mxu0 %v33
    %68 = vmatprep.subr.mxu0 0.0
    %69 = vmatpush1.msra.mxu0 0.0
    %70 = vmatprep.subr.mxu0 0.0
    %71 = vmatpush1.msra.mxu0 0.0
    %72 = vmatprep.subr.mxu0 0.0
    %73 = vmatpush1.msra.mxu0 0.0
    %74 = vmatprep.subr.mxu0 0.0
    %75 = vmatpush1.msra.mxu0 0.0
    %76 = vmatprep.subr.mxu0 0.0
    %77 = vmatpush1.msra.mxu0 0.0
    %78 = vmatprep.subr.mxu0 0.0
    %79 = vmatpush1.msra.mxu0 0.0
    %80 = vmatprep.subr.mxu0 0.0
    %81 = vmatpush1.msra.mxu0 0.0
    %82 = vmatprep.subr.mxu0 0.0
    %83 = vmatpush1.msra.mxu0 0.0
    %84 = vmatprep.subr.mxu0 0.0
    %85 = vmatpush1.msra.mxu0 0.0
    %86 = vmatprep.subr.mxu0 0.0
    %87 = vmatpush1.msra.mxu0 0.0
    %88 = vmatprep.subr.mxu0 0.0
    %89 = vmatpush1.msra.mxu0 0.0
    %90 = vmatprep.subr.mxu0 0.0
    %91 = vmatpush1.msra.mxu0 0.0
    %92 = vmatprep.subr.mxu0 0.0
    %93 = vmatpush1.msra.mxu0 0.0
    %94 = vmatprep.subr.mxu0 0.0
    %95 = vmatpush1.msra.mxu0 0.0
    %96 = vmatprep.subr.mxu0 0.0
    %97 = vmatpush1.msra.mxu0 0.0
    %98 = vmatprep.subr.mxu0 0.0
    %99 = vmatpush1.msra.mxu0 0.0
    %100 = vmatprep.mubr.f32.mxu0 0.0
    %101 = vmatmul.mubr.f32.gmra.mrb[0].mxu0 %v17
    %v102 = vpop.f32.mrb[0].mxu0
    %v103 = vadd.f32 %v35, %v102
    %v104 = vpop.f32.mrb[0].mxu0
    %105 = vdwg.mxu0
    %v106 = vxor.u32 %v103, 2147483648
    %v107 = vmul.f32 %v106, 1.442695
    %v108 = vpow.pop %v107
    %v109 = vadd.f32 %v108, 1.0
    %v110 = vrcp.pop %v109
    %v111 = vmul.f32 1.0, %v110
    %v112 = vmul.f32 %v111, 8.0
    %vm113 = vcmask 27648
    %114 = vst.msk [vmem:[#allocation3] sm:$0xf] %vm113, %v112
    // Predicated region
    $region14: #{tpu_custom_call.1} parent=1 // pred_check
      _
    $region15: #{tpu_custom_call.1} parent=1 // pred_check_branch
      %116 = sbr.rel (0) target = $region17
    $region16: #{tpu_custom_call.1} parent=1 // pred_region
      %s118 = ssub.s32 64, 64
      %119 = vsyncadd [#allocation4], %s118
      %s121 = sshll.u32 [#allocation3], 4
      %s122 = int_to_ptr.vmem [resolvable:$true] %s121
      %124 = dma.vmem_to_hbm [thread:$0]  %s122, 64, %s3, [#allocation4]
    $region17: #{tpu_custom_call.1} parent=1 // pred_fallthru
      _
    // Predicated region
    $region18: #{tpu_custom_call.1} parent=1 // pred_check
      _
    $region19: #{tpu_custom_call.1} parent=1 // pred_check_branch
      %126 = sbr.rel (0) target = $region21
    $region20: #{tpu_custom_call.1} parent=1 // pred_region
      %127 = dma.done [#allocation4], 64
    $region21: #{tpu_custom_call.1} parent=1 // pred_fallthru
      _
    %128 = vsyncpa [#allocation4], 1

</llo_original>
